<compile_context>
chip_gen: v6e
topology: v6e:2x2x1
jax: 0.10.0
libtpu: 0.0.40
codegen_flags: <defaults>
</compile_context>

<pallas_src>
import jax
import jax.numpy as jnp
from jax.experimental import pallas as pl
from jax.experimental.pallas import tpu as pltpu


def _round_up(x, m):
    return ((x + m - 1) // m) * m


# ---------------------------------------------------------------------------
# Kernel (transposed: features on sublanes, batch on lanes)
# ---------------------------------------------------------------------------
def _make_critic_kernel(n_hidden_layers):
    """Fused MLP-critic kernel for a fixed number of hidden layers."""

    def kernel(*refs):
        # refs = (x_t, W1^T, b1_col, ..., Wn^T, bn_col, wv_col, bv, v_out)
        x_ref = refs[0]
        v_ref = refs[-1]
        param_refs = refs[1:-1]

        h = x_ref[...]                                   # (d0, TM), bf16 (or f32)
        # Static unroll over hidden layers (2-3 layers): lets the EUP tanh of
        # layer i overlap the MXU push of layer i+1.
        for i in range(n_hidden_layers):
            w_t = param_refs[2 * i][...]                 # (d_out, d_in), bf16/f32
            b_col = param_refs[2 * i + 1][...]           # (d_out, 1), f32
            acc = jnp.dot(w_t, h.astype(w_t.dtype),
                          preferred_element_type=jnp.float32)   # (d_out, TM) f32
            h = jnp.tanh(acc + b_col)                    # f32 bias-add + tanh

        # Value head: N=1 "matmul" as broadcast-mul + sublane reduce (VPU+XLU);
        # result is a lane-dense (1, TM) row -> unmasked full-lane store.
        wv_col = param_refs[-2][...]                     # (d_last, 1), f32
        bv = param_refs[-1][...]                         # (1, 1), f32
        v = jnp.sum(h * wv_col, axis=0, keepdims=True) + bv
        v_ref[...] = v.astype(v_ref.dtype)

    return kernel


# ---------------------------------------------------------------------------
# Wrapper
# ---------------------------------------------------------------------------
def critic_forward(x, params, *, tm=8192, use_bf16_matmul=True,
                   vmem_budget_bytes=16 << 20):
    """params: list of (W, b) with W:(in,out), b:(1,out); last pair is V_head."""
    n_hidden = len(params) - 1
    batch, obs_dim = x.shape

    mx_dtype = jnp.bfloat16 if use_bf16_matmul else jnp.float32

    # ---- Flatten params: transposed weights, column biases -----------------
    flat_params = []
    hidden_widths = []
    for w, b in params[:-1]:
        flat_params.append(jnp.asarray(w).T.astype(mx_dtype))          # (d_out, d_in)
        flat_params.append(jnp.asarray(b).reshape(-1, 1).astype(jnp.float32))
        hidden_widths.append(w.shape[1])
    wv, bv = params[-1]
    flat_params.append(jnp.asarray(wv).reshape(-1, 1).astype(jnp.float32))  # (d_last,1)
    flat_params.append(jnp.asarray(bv).reshape(1, 1).astype(jnp.float32))

    # ---- Tile sizing (batch on lanes: TM is a multiple of 128) -------------
    param_bytes = sum(int(p.size) * p.dtype.itemsize for p in flat_params)
    x_itemsize = jnp.dtype(mx_dtype).itemsize
    # Per-lane (per batch row) VMEM bytes: double-buffered x column + f32 and
    # bf16 activation copies per hidden layer + double-buffered f32 out row.
    per_row = (2 * obs_dim * x_itemsize
               + sum(hidden_widths) * (4 + x_itemsize)
               + 2 * 4)
    cap_rows = (max(0, vmem_budget_bytes - 2 * param_bytes) // max(per_row, 1))
    cap_rows = max(128, (cap_rows // 128) * 128)
    tm_cap = min(_round_up(max(tm, 128), 128), cap_rows)

    padded128 = max(128, _round_up(batch, 128))
    if padded128 <= 128:
        tile = 128
    else:
        # Keep >= 2 grid steps so the "parallel" axis feeds both v7x TCs.
        n_steps = max(2, pl.cdiv(padded128, tm_cap))
        tile = _round_up(pl.cdiv(padded128, n_steps), 128)
    grid_n = pl.cdiv(padded128, tile)
    padded = grid_n * tile

    # ---- Input prep: cast to matmul dtype, transpose, pad only remainder ---
    # (Transposed layout: lane dim is the batch, sublane dim is obs_dim which
    #  is a full-array block dim, so no (8/16,128) packing hazard for bf16.)
    x_t = x.astype(mx_dtype).T                          # (obs_dim, batch)
    if padded != batch:
        x_t = jnp.pad(x_t, ((0, 0), (0, padded - batch)))

    # ---- Specs --------------------------------------------------------------
    in_specs = [pl.BlockSpec((obs_dim, tile), lambda i: (0, i))]
    for p in flat_params:
        # Full-array blocks; constant index_map -> params stay VMEM resident.
        in_specs.append(pl.BlockSpec(p.shape, lambda i: (0, 0)))
    out_spec = pl.BlockSpec((1, tile), lambda i: (0, i))
    out_shape = jax.ShapeDtypeStruct((1, padded), jnp.float32)

    # ---- Cost estimate (advisory; helps XLA schedule surrounding PPO ops) ---
    dims = [obs_dim] + hidden_widths
    flops = sum(2 * padded * dims[i] * dims[i + 1] for i in range(len(dims) - 1))
    flops += 2 * padded * dims[-1]                      # value head
    transcendentals = padded * sum(hidden_widths)       # tanh per hidden activation
    bytes_accessed = (int(x_t.size) * x_t.dtype.itemsize
                      + param_bytes + padded * 4)
    cost = pl.CostEstimate(flops=flops,
                           transcendentals=transcendentals,
                           bytes_accessed=bytes_accessed)

    kernel = _make_critic_kernel(n_hidden)
    v_row = pl.pallas_call(
        kernel,
        out_shape=out_shape,
        grid=(grid_n,),
        in_specs=in_specs,
        out_specs=out_spec,
        compiler_params=pltpu.CompilerParams(
            dimension_semantics=("parallel",),          # shard tiles on v7x dual TC
            vmem_limit_bytes=32 << 20,                  # raise v5e's 16 MiB default,
        ),                                              # safe within v7x physical VMEM
        cost_estimate=cost,
    )(x_t, *flat_params)

    # Back to the module's (batch, 1) shape; padded lanes are sliced off.
    return v_row[0, :batch].reshape(batch, 1)


# ---------------------------------------------------------------------------
# Deterministic parameter construction (mirrors ortho_init in the module).
# ---------------------------------------------------------------------------
def _ortho_weight(key, in_dim, out_dim, gain):
    """Orthogonal init (QR of a Gaussian), returned as (in_dim, out_dim)."""
    big, small = max(in_dim, out_dim), min(in_dim, out_dim)
    a = jax.random.normal(key, (big, small), dtype=jnp.float32)
    q, r = jnp.linalg.qr(a)
    q = q * jnp.sign(jnp.diagonal(r))[None, :]
    if in_dim < out_dim:
        q = q.T
    return (gain * q[:in_dim, :out_dim]).astype(jnp.float32)


def make_critic_params(key, obs_dim, hidden_sizes):
    """Hidden layers use tanh gain (5/3); V_head uses gain 1.0; biases are 0."""
    params = []
    dims = [obs_dim] + list(hidden_sizes)
    tanh_gain = 5.0 / 3.0
    for i in range(len(hidden_sizes)):
        key, sub = jax.random.split(key)
        w = _ortho_weight(sub, dims[i], dims[i + 1], tanh_gain)
        b = jnp.zeros((1, dims[i + 1]), dtype=jnp.float32)
        params.append((w, b))
    key, sub = jax.random.split(key)
    wv = _ortho_weight(sub, dims[-1], 1, 1.0)
    bv = jnp.zeros((1, 1), dtype=jnp.float32)
    params.append((wv, bv))
    return params


# ---------------------------------------------------------------------------
# References for correctness checking.
# ---------------------------------------------------------------------------
def critic_reference_f32(x, params):
    """Pure-f32 reference (module semantics)."""
    h = x.astype(jnp.float32)
    for w, b in params[:-1]:
        h = jnp.tanh(h @ w + b)
    wv, bv = params[-1]
    return h @ wv + bv


def critic_reference_matched(x, params, use_bf16_matmul=True):
    """Reference with the same bf16-matmul / f32-accumulate math as the kernel."""
    dt = jnp.bfloat16 if use_bf16_matmul else jnp.float32
    h = x.astype(dt)
    for w, b in params[:-1]:
        acc = jnp.dot(h.astype(dt), w.astype(dt),
                      preferred_element_type=jnp.float32)
        h = jnp.tanh(acc + b)
    wv, bv = params[-1]
    return jnp.sum(h * wv.reshape(1, -1), axis=-1, keepdims=True) + bv


if __name__ == "__main__":
    # Shapes implied by the forward pass:
    #   observation flatdim = 16, config['nn.sizes'] = [32, 32].
    key = jax.random.PRNGKey(0)
    key, pkey, xkey, xkey2, xkey3 = jax.random.split(key, 5)

    obs_dim = 16
    hidden_sizes = [32, 32]
    params = make_critic_params(pkey, obs_dim, hidden_sizes)

    # Check 1: batch that splits into 2 "parallel" grid tiles (no padding).
    batch = 512
    x = jax.random.normal(xkey, (batch, obs_dim), dtype=jnp.float32)
    v = jax.block_until_ready(critic_forward(x, params))
    assert v.shape == (batch, 1), v.shape
    v_ref_matched = critic_reference_matched(x, params)
    v_ref_f32 = critic_reference_f32(x, params)
    assert jnp.allclose(v, v_ref_matched, atol=1e-4, rtol=1e-4), (
        float(jnp.max(jnp.abs(v - v_ref_matched))))
    assert jnp.allclose(v, v_ref_f32, atol=5e-2, rtol=5e-2), (
        float(jnp.max(jnp.abs(v - v_ref_f32))))

    # Check 2: tiny batch (single 128-lane tile, padded lanes sliced off).
    batch_small = 8
    x_s = jax.random.normal(xkey2, (batch_small, obs_dim), dtype=jnp.float32)
    v_s = jax.block_until_ready(critic_forward(x_s, params))
    assert v_s.shape == (batch_small, 1), v_s.shape
    v_s_ref = critic_reference_matched(x_s, params)
    assert jnp.allclose(v_s, v_s_ref, atol=1e-4, rtol=1e-4), (
        float(jnp.max(jnp.abs(v_s - v_s_ref))))

    # Check 3: ragged batch -> multi-tile grid + padded remainder path.
    batch_ragged = 200
    x_r = jax.random.normal(xkey3, (batch_ragged, obs_dim), dtype=jnp.float32)
    v_r = jax.block_until_ready(critic_forward(x_r, params))
    assert v_r.shape == (batch_ragged, 1), v_r.shape
    v_r_ref = critic_reference_matched(x_r, params)
    assert jnp.allclose(v_r, v_r_ref, atol=1e-4, rtol=1e-4), (
        float(jnp.max(jnp.abs(v_r - v_r_ref))))

    print("KERNEL_OK")
</pallas_src>

<mosaic_0001>
module attributes {stable_mosaic.version = 11 : i64} {
  func.func @kernel(%arg0: i32, %arg1: memref<16x256xbf16, #tpu.memory_space<vmem>>, %arg2: memref<32x16xbf16, #tpu.memory_space<vmem>>, %arg3: memref<32x1xf32, #tpu.memory_space<vmem>>, %arg4: memref<32x32xbf16, #tpu.memory_space<vmem>>, %arg5: memref<32x1xf32, #tpu.memory_space<vmem>>, %arg6: memref<32x1xf32, #tpu.memory_space<vmem>>, %arg7: memref<1x1xf32, #tpu.memory_space<vmem>>, %arg8: memref<1x256xf32, #tpu.memory_space<vmem>>) attributes {dimension_semantics = [#tpu.dimension_semantics<parallel>], iteration_bounds = array<i64: 2>, scalar_prefetch = 0 : i64, scratch_operands = 0 : i64, tpu.core_type = #tpu.core_type<tc>, window_params = [{transform_indices = @transform_0, window_bounds = array<i64: 16, 256>}, {pipeline_mode = #tpu.pipeline_mode<synchronous>, transform_indices = @transform_1, window_bounds = array<i64: 32, 16>}, {pipeline_mode = #tpu.pipeline_mode<synchronous>, transform_indices = @transform_2, window_bounds = array<i64: 32, 1>}, {pipeline_mode = #tpu.pipeline_mode<synchronous>, transform_indices = @transform_3, window_bounds = array<i64: 32, 32>}, {pipeline_mode = #tpu.pipeline_mode<synchronous>, transform_indices = @transform_4, window_bounds = array<i64: 32, 1>}, {pipeline_mode = #tpu.pipeline_mode<synchronous>, transform_indices = @transform_5, window_bounds = array<i64: 32, 1>}, {pipeline_mode = #tpu.pipeline_mode<synchronous>, transform_indices = @transform_6, window_bounds = array<i64: 1, 1>}, {transform_indices = @transform_7, window_bounds = array<i64: 1, 256>}]} {
    %c0 = arith.constant 0 : index
    %c0_0 = arith.constant 0 : index
    %0 = vector.load %arg1[%c0, %c0_0] : memref<16x256xbf16, #tpu.memory_space<vmem>>, vector<16x256xbf16>
    %c0_1 = arith.constant 0 : index
    %c0_2 = arith.constant 0 : index
    %1 = vector.load %arg2[%c0_1, %c0_2] : memref<32x16xbf16, #tpu.memory_space<vmem>>, vector<32x16xbf16>
    %c0_3 = arith.constant 0 : index
    %c0_4 = arith.constant 0 : index
    %2 = vector.load %arg3[%c0_3, %c0_4] : memref<32x1xf32, #tpu.memory_space<vmem>>, vector<32x1xf32>
    %cst = arith.constant dense<0.000000e+00> : vector<32x256xf32>
    %3 = tpu.matmul %1, %0, %cst {dimension_numbers = #tpu.dot_dimension_numbers<[1], [0], [0], [1], [0, 0, 1, 1], [], []>} : vector<32x16xbf16>, vector<16x256xbf16>, vector<32x256xf32> -> vector<32x256xf32>
    %4 = vector.broadcast %2 : vector<32x1xf32> to vector<32x256xf32>
    %5 = arith.addf %3, %4 : vector<32x256xf32>
    %6 = math.tanh %5 : vector<32x256xf32>
    %c0_5 = arith.constant 0 : index
    %c0_6 = arith.constant 0 : index
    %7 = vector.load %arg4[%c0_5, %c0_6] : memref<32x32xbf16, #tpu.memory_space<vmem>>, vector<32x32xbf16>
    %c0_7 = arith.constant 0 : index
    %c0_8 = arith.constant 0 : index
    %8 = vector.load %arg5[%c0_7, %c0_8] : memref<32x1xf32, #tpu.memory_space<vmem>>, vector<32x1xf32>
    %9 = arith.truncf %6 : vector<32x256xf32> to vector<32x256xbf16>
    %cst_9 = arith.constant dense<0.000000e+00> : vector<32x256xf32>
    %10 = tpu.matmul %7, %9, %cst_9 {dimension_numbers = #tpu.dot_dimension_numbers<[1], [0], [0], [1], [0, 0, 1, 1], [], []>} : vector<32x32xbf16>, vector<32x256xbf16>, vector<32x256xf32> -> vector<32x256xf32>
    %11 = vector.broadcast %8 : vector<32x1xf32> to vector<32x256xf32>
    %12 = arith.addf %10, %11 : vector<32x256xf32>
    %13 = math.tanh %12 : vector<32x256xf32>
    %c0_10 = arith.constant 0 : index
    %c0_11 = arith.constant 0 : index
    %14 = vector.load %arg6[%c0_10, %c0_11] : memref<32x1xf32, #tpu.memory_space<vmem>>, vector<32x1xf32>
    %c0_12 = arith.constant 0 : index
    %c0_13 = arith.constant 0 : index
    %15 = vector.load %arg7[%c0_12, %c0_13] : memref<1x1xf32, #tpu.memory_space<vmem>>, vector<1x1xf32>
    %16 = vector.broadcast %14 : vector<32x1xf32> to vector<32x256xf32>
    %17 = arith.mulf %13, %16 : vector<32x256xf32>
    %cst_14 = arith.constant dense<0.000000e+00> : vector<256xf32>
    %18 = vector.multi_reduction <add>, %17, %cst_14 [0] : vector<32x256xf32> to vector<256xf32>
    %19 = vector.shape_cast %18 : vector<256xf32> to vector<1x256xf32>
    %20 = vector.broadcast %15 : vector<1x1xf32> to vector<1x256xf32>
    %21 = arith.addf %19, %20 : vector<1x256xf32>
    %c0_15 = arith.constant 0 : index
    %c0_16 = arith.constant 0 : index
    %22 = vector.load %arg8[%c0_15, %c0_16] : memref<1x256xf32, #tpu.memory_space<vmem>>, vector<1x256xf32>
    tpu.vector_store %arg8[%c0_15, %c0_16], %21 {strides = array<i32>} : memref<1x256xf32, #tpu.memory_space<vmem>>, vector<1x256xf32>,
    return
  }
  func.func @transform_0(%arg0: i32) -> (i32, i32) {
    %c0_i32 = arith.constant 0 : i32
    %c0_i32_0 = arith.constant 0 : i32
    return %c0_i32, %arg0 : i32, i32
  }
  func.func @transform_1(%arg0: i32) -> (i32, i32) {
    %c0_i32 = arith.constant 0 : i32
    %c0_i32_0 = arith.constant 0 : i32
    %c0_i32_1 = arith.constant 0 : i32
    return %c0_i32, %c0_i32_0 : i32, i32
  }
  func.func @transform_2(%arg0: i32) -> (i32, i32) {
    %c0_i32 = arith.constant 0 : i32
    %c0_i32_0 = arith.constant 0 : i32
    %c0_i32_1 = arith.constant 0 : i32
    return %c0_i32, %c0_i32_0 : i32, i32
  }
  func.func @transform_3(%arg0: i32) -> (i32, i32) {
    %c0_i32 = arith.constant 0 : i32
    %c0_i32_0 = arith.constant 0 : i32
    %c0_i32_1 = arith.constant 0 : i32
    return %c0_i32, %c0_i32_0 : i32, i32
  }
  func.func @transform_4(%arg0: i32) -> (i32, i32) {
    %c0_i32 = arith.constant 0 : i32
    %c0_i32_0 = arith.constant 0 : i32
    %c0_i32_1 = arith.constant 0 : i32
    return %c0_i32, %c0_i32_0 : i32, i32
  }
  func.func @transform_5(%arg0: i32) -> (i32, i32) {
    %c0_i32 = arith.constant 0 : i32
    %c0_i32_0 = arith.constant 0 : i32
    %c0_i32_1 = arith.constant 0 : i32
    return %c0_i32, %c0_i32_0 : i32, i32
  }
  func.func @transform_6(%arg0: i32) -> (i32, i32) {
    %c0_i32 = arith.constant 0 : i32
    %c0_i32_0 = arith.constant 0 : i32
    %c0_i32_1 = arith.constant 0 : i32
    return %c0_i32, %c0_i32_0 : i32, i32
  }
  func.func @transform_7(%arg0: i32) -> (i32, i32) {
    %c0_i32 = arith.constant 0 : i32
    %c0_i32_0 = arith.constant 0 : i32
    return %c0_i32, %arg0 : i32, i32
  }
}

</mosaic_0001>

<llo_original>
// kernel: tpu_custom_call.1
$region0: #{tpu_custom_call.1}
  #allocation0 [shape = 'u32[]', space=smem, size = 0x4, offset = 0x4, fixed_abs, tag = 'smem constant byte address 0x4 - core index']
  #allocation1 [shape = 'u32[144,128]{1,0:T(1,128)}', space=vmem, size = 0x12000, scoped, tag = 'internal scratch']
  #allocation2 [shape = 'f32[1,1]{1,0:T(1,128)S(1)}', space=vmem, size = 0x200, scoped, tag = 'scoped memory for tpu_custom_call.1']
  %s0 = inlined_call_operand.vmem [shape: bf16[16,512], index: 0, kind: input, shape index: {}]
  %s1 = inlined_call_operand.vmem [shape: bf16[32,16], index: 1, kind: input, shape index: {}]
  %s2 = inlined_call_operand.vmem [shape: f32[32,1], index: 2, kind: input, shape index: {}]
  %s3 = inlined_call_operand.vmem [shape: bf16[32,32], index: 3, kind: input, shape index: {}]
  %s4 = inlined_call_operand.vmem [shape: f32[32,1], index: 4, kind: input, shape index: {}]
  %s5 = inlined_call_operand.vmem [shape: f32[32,1], index: 5, kind: input, shape index: {}]
  %s6 = inlined_call_operand.<no memory space> [shape: f32[1,1], index: 6, kind: input, shape index: {}]
  %s7 = inlined_call_operand.hbm [shape: f32[1,512], index: 7, kind: output, shape index: {}]
  %s8 = sld [smem:[#allocation0]]
  $region99: #{tpu_custom_call.1} parent=0
    _
  %s10 = ssub.s32 1, %s8
  %s11 = scalar_select 0, %s10, %s8
  %v12 = vstv %s6
  %13 = vst [vmem:[#allocation2] sm:$0x1] %v12
  $region1: #{tpu_custom_call.1} parent=0
    #allocation3 [shape = 'u8[16384]{0}', space=vmem, size = 0x4000, scoped, tag = 'input window, operand 0']
    #allocation4 [shape = 'u8[2048]{0}', space=vmem, size = 0x800, scoped, tag = 'output window, operand 0']
    #allocation5 [shape = 's32[2]{0}', space=sflag, size = 0x8, scoped, tag = 'scoped memory for tpu_custom_call.1']
    %14 = vsyncpa [#allocation5], 0
    %s15 = scalar_lea.sflag [#allocation5], 1
    %16 = vsyncpa %s15, 0
    loop: start=0, step=1, limit=4
    $region2: #{tpu_custom_call.1} parent=1 // loop_pre_header
      _
    $region3: #{tpu_custom_call.1} parent=1 // loop_header
      %s18 = sphi 0, %s22
      %p19 = scmp.ge.s32.totalorder %s18, 4
      %s28 = sphi 0, %s30
      %s31 = sphi 0, %s28
      %s32 = sphi 0, %s31
      %s48 = sphi 0, %s32
      %s52 = sphi 0, %s52
      %s54 = sphi 0, %s52
      %s55 = sphi 0, %s54
      %s69 = sphi 0, %s55
      %s73 = sphi 0, %s73
      %s75 = sphi 0, %s73
      %s76 = sphi 0, %s75
      %s90 = sphi 0, %s76
      %s94 = sphi 0, %s94
      %s96 = sphi 0, %s94
      %s97 = sphi 0, %s96
      %s111 = sphi 0, %s97
      %s115 = sphi 0, %s115
      %s117 = sphi 0, %s115
      %s118 = sphi 0, %s117
      %s132 = sphi 0, %s118
      %s136 = sphi 0, %s136
      %s138 = sphi 0, %s136
      %s139 = sphi 0, %s138
      %s153 = sphi 0, %s139
      %s157 = sphi 0, %s157
      %s159 = sphi 0, %s157
      %s160 = sphi 0, %s159
      %s174 = sphi 0, %s160
      %s180 = sphi 0, %s182
      %s183 = sphi 0, %s180
      %s184 = sphi 0, %s183
      %s200 = sphi 0, %s184
    $region4: #{tpu_custom_call.1} parent=1 // loop_header_branch
      %21 = sbr.rel (%p19) target = $region8
    $region5: #{tpu_custom_call.1} parent=1 // loop_body
      %s23 = ssub.s32 %s18, 1
      %s24 = ssub.s32 %s18, 2
      %s25 = sadd.s32 %s18, 1
      %s26 = ssub.s32 %s18, %s25
      %p27 = scmp.eq.s32.totalorder %s26, 0
      %s29 = sadd.s32 %s28, 1
      %s30 = scalar_select %p27, %s28, %s29
      %p33 = pneg %p27
      %p34 = scmp.eq.s32.totalorder %s18, 1
      %p35 = por %p33, %p34
      %p36 = scmp.ne.s32.totalorder %s28, %s31
      %p37 = scmp.eq.s32.totalorder %s18, 0
      %p38 = por %p36, %p37
      %p39 = scmp.ne.s32.totalorder %s28, %s31
      %p40 = scmp.eq.s32.totalorder %s23, 1
      %p41 = por %p39, %p40
      %p42 = scmp.ne.s32.totalorder %s31, %s32
      %p43 = scmp.eq.s32.totalorder %s23, 0
      %p44 = por %p42, %p43
      %p45 = scmp.ne.s32.totalorder %s31, %s32
      %p46 = scmp.eq.s32.totalorder %s24, 1
      %p47 = por %p45, %p46
      %p49 = scmp.ne.s32.totalorder %s32, %s48
      %p50 = scmp.eq.s32.totalorder %s24, 0
      %p51 = por %p49, %p50
      %s53 = sadd.s32 %s52, 1
      %p56 = scmp.eq.s32.totalorder %s18, 1
      %p57 = scmp.ne.s32.totalorder %s52, %s54
      %p58 = scmp.eq.s32.totalorder %s18, 0
      %p59 = por %p57, %p58
      %p60 = scmp.ne.s32.totalorder %s52, %s54
      %p61 = scmp.eq.s32.totalorder %s23, 1
      %p62 = por %p60, %p61
      %p63 = scmp.ne.s32.totalorder %s54, %s55
      %p64 = scmp.eq.s32.totalorder %s23, 0
      %p65 = por %p63, %p64
      %p66 = scmp.ne.s32.totalorder %s54, %s55
      %p67 = scmp.eq.s32.totalorder %s24, 1
      %p68 = por %p66, %p67
      %p70 = scmp.ne.s32.totalorder %s55, %s69
      %p71 = scmp.eq.s32.totalorder %s24, 0
      %p72 = por %p70, %p71
      %s74 = sadd.s32 %s73, 1
      %p77 = scmp.eq.s32.totalorder %s18, 1
      %p78 = scmp.ne.s32.totalorder %s73, %s75
      %p79 = scmp.eq.s32.totalorder %s18, 0
      %p80 = por %p78, %p79
      %p81 = scmp.ne.s32.totalorder %s73, %s75
      %p82 = scmp.eq.s32.totalorder %s23, 1
      %p83 = por %p81, %p82
      %p84 = scmp.ne.s32.totalorder %s75, %s76
      %p85 = scmp.eq.s32.totalorder %s23, 0
      %p86 = por %p84, %p85
      %p87 = scmp.ne.s32.totalorder %s75, %s76
      %p88 = scmp.eq.s32.totalorder %s24, 1
      %p89 = por %p87, %p88
      %p91 = scmp.ne.s32.totalorder %s76, %s90
      %p92 = scmp.eq.s32.totalorder %s24, 0
      %p93 = por %p91, %p92
      %s95 = sadd.s32 %s94, 1
      %p98 = scmp.eq.s32.totalorder %s18, 1
      %p99 = scmp.ne.s32.totalorder %s94, %s96
      %p100 = scmp.eq.s32.totalorder %s18, 0
      %p101 = por %p99, %p100
      %p102 = scmp.ne.s32.totalorder %s94, %s96
      %p103 = scmp.eq.s32.totalorder %s23, 1
      %p104 = por %p102, %p103
      %p105 = scmp.ne.s32.totalorder %s96, %s97
      %p106 = scmp.eq.s32.totalorder %s23, 0
      %p107 = por %p105, %p106
      %p108 = scmp.ne.s32.totalorder %s96, %s97
      %p109 = scmp.eq.s32.totalorder %s24, 1
      %p110 = por %p108, %p109
      %p112 = scmp.ne.s32.totalorder %s97, %s111
      %p113 = scmp.eq.s32.totalorder %s24, 0
      %p114 = por %p112, %p113
      %s116 = sadd.s32 %s115, 1
      %p119 = scmp.eq.s32.totalorder %s18, 1
      %p120 = scmp.ne.s32.totalorder %s115, %s117
      %p121 = scmp.eq.s32.totalorder %s18, 0
      %p122 = por %p120, %p121
      %p123 = scmp.ne.s32.totalorder %s115, %s117
      %p124 = scmp.eq.s32.totalorder %s23, 1
      %p125 = por %p123, %p124
      %p126 = scmp.ne.s32.totalorder %s117, %s118
      %p127 = scmp.eq.s32.totalorder %s23, 0
      %p128 = por %p126, %p127
      %p129 = scmp.ne.s32.totalorder %s117, %s118
      %p130 = scmp.eq.s32.totalorder %s24, 1
      %p131 = por %p129, %p130
      %p133 = scmp.ne.s32.totalorder %s118, %s132
      %p134 = scmp.eq.s32.totalorder %s24, 0
      %p135 = por %p133, %p134
      %s137 = sadd.s32 %s136, 1
      %p140 = scmp.eq.s32.totalorder %s18, 1
      %p141 = scmp.ne.s32.totalorder %s136, %s138
      %p142 = scmp.eq.s32.totalorder %s18, 0
      %p143 = por %p141, %p142
      %p144 = scmp.ne.s32.totalorder %s136, %s138
      %p145 = scmp.eq.s32.totalorder %s23, 1
      %p146 = por %p144, %p145
      %p147 = scmp.ne.s32.totalorder %s138, %s139
      %p148 = scmp.eq.s32.totalorder %s23, 0
      %p149 = por %p147, %p148
      %p150 = scmp.ne.s32.totalorder %s138, %s139
      %p151 = scmp.eq.s32.totalorder %s24, 1
      %p152 = por %p150, %p151
      %p154 = scmp.ne.s32.totalorder %s139, %s153
      %p155 = scmp.eq.s32.totalorder %s24, 0
      %p156 = por %p154, %p155
      %s158 = sadd.s32 %s157, 1
      %p161 = scmp.eq.s32.totalorder %s18, 1
      %p162 = scmp.ne.s32.totalorder %s157, %s159
      %p163 = scmp.eq.s32.totalorder %s18, 0
      %p164 = por %p162, %p163
      %p165 = scmp.ne.s32.totalorder %s157, %s159
      %p166 = scmp.eq.s32.totalorder %s23, 1
      %p167 = por %p165, %p166
      %p168 = scmp.ne.s32.totalorder %s159, %s160
      %p169 = scmp.eq.s32.totalorder %s23, 0
      %p170 = por %p168, %p169
      %p171 = scmp.ne.s32.totalorder %s159, %s160
      %p172 = scmp.eq.s32.totalorder %s24, 1
      %p173 = por %p171, %p172
      %p175 = scmp.ne.s32.totalorder %s160, %s174
      %p176 = scmp.eq.s32.totalorder %s24, 0
      %p177 = por %p175, %p176
      %s178 = ssub.s32 %s18, %s25
      %p179 = scmp.eq.s32.totalorder %s178, 0
      %s181 = sadd.s32 %s180, 1
      %s182 = scalar_select %p179, %s180, %s181
      %p185 = pneg %p179
      %p186 = scmp.eq.s32.totalorder %s18, 1
      %p187 = por %p185, %p186
      %p188 = scmp.ne.s32.totalorder %s180, %s183
      %p189 = scmp.eq.s32.totalorder %s18, 0
      %p190 = por %p188, %p189
      %p191 = scmp.ne.s32.totalorder %s180, %s183
      %p192 = scmp.eq.s32.totalorder %s23, 1
      %p193 = por %p191, %p192
      %p194 = scmp.ne.s32.totalorder %s183, %s184
      %p195 = scmp.eq.s32.totalorder %s23, 0
      %p196 = por %p194, %p195
      %p197 = scmp.ne.s32.totalorder %s183, %s184
      %p198 = scmp.eq.s32.totalorder %s24, 1
      %p199 = por %p197, %p198
      %p201 = scmp.ne.s32.totalorder %s184, %s200
      %p202 = scmp.eq.s32.totalorder %s24, 0
      %p203 = por %p201, %p202
      %p204 = scmp.le.s32.totalorder 1, %s18
      %p205 = scmp.lt.s32.totalorder %s18, 3
      %p206 = pnand %p204, %p205
      %p207 = pneg %p206
      // Predicated region
      $region9: #{tpu_custom_call.1} parent=5 // pred_check
        _
      $region10: #{tpu_custom_call.1} parent=5 // pred_check_branch
        %209 = sbr.rel (%p206) target = $region12
      $region11: #{tpu_custom_call.1} parent=5 // pred_region
        %s210 = ssub.s32 %s18, 1
        // Predicated region
        $region13: #{tpu_custom_call.1} parent=11 // pred_check
          %p211 = pneg %p65
        $region14: #{tpu_custom_call.1} parent=11 // pred_check_branch
          %213 = sbr.rel (%p211) target = $region16
        $region15: #{tpu_custom_call.1} parent=11 // pred_region
          _
        $region16: #{tpu_custom_call.1} parent=11 // pred_fallthru
          _
        // Predicated region
        $region17: #{tpu_custom_call.1} parent=11 // pred_check
          %p214 = pneg %p86
        $region18: #{tpu_custom_call.1} parent=11 // pred_check_branch
          %216 = sbr.rel (%p214) target = $region20
        $region19: #{tpu_custom_call.1} parent=11 // pred_region
          _
        $region20: #{tpu_custom_call.1} parent=11 // pred_fallthru
          _
        // Predicated region
        $region21: #{tpu_custom_call.1} parent=11 // pred_check
          %p217 = pneg %p107
        $region22: #{tpu_custom_call.1} parent=11 // pred_check_branch
          %219 = sbr.rel (%p217) target = $region24
        $region23: #{tpu_custom_call.1} parent=11 // pred_region
          _
        $region24: #{tpu_custom_call.1} parent=11 // pred_fallthru
          _
        // Predicated region
        $region25: #{tpu_custom_call.1} parent=11 // pred_check
          %p220 = pneg %p128
        $region26: #{tpu_custom_call.1} parent=11 // pred_check_branch
          %222 = sbr.rel (%p220) target = $region28
        $region27: #{tpu_custom_call.1} parent=11 // pred_region
          _
        $region28: #{tpu_custom_call.1} parent=11 // pred_fallthru
          _
        // Predicated region
        $region29: #{tpu_custom_call.1} parent=11 // pred_check
          %p223 = pneg %p149
        $region30: #{tpu_custom_call.1} parent=11 // pred_check_branch
          %225 = sbr.rel (%p223) target = $region32
        $region31: #{tpu_custom_call.1} parent=11 // pred_region
          _
        $region32: #{tpu_custom_call.1} parent=11 // pred_fallthru
          _
        // Predicated region
        $region33: #{tpu_custom_call.1} parent=11 // pred_check
          %p226 = pneg %p170
        $region34: #{tpu_custom_call.1} parent=11 // pred_check_branch
          %228 = sbr.rel (%p226) target = $region36
        $region35: #{tpu_custom_call.1} parent=11 // pred_region
          _
        $region36: #{tpu_custom_call.1} parent=11 // pred_fallthru
          _
      $region12: #{tpu_custom_call.1} parent=5 // pred_fallthru
        _
      %p229 = scmp.lt.s32.totalorder %s18, 2
      // Predicated region
      $region37: #{tpu_custom_call.1} parent=5 // pred_check
        %p230 = pneg %p229
      $region38: #{tpu_custom_call.1} parent=5 // pred_check_branch
        %232 = sbr.rel (%p230) target = $region40
      $region39: #{tpu_custom_call.1} parent=5 // pred_region
        // Predicated region
        $region41: #{tpu_custom_call.1} parent=39 // pred_check
          %p233 = pneg %p38
        $region42: #{tpu_custom_call.1} parent=39 // pred_check_branch
          %235 = sbr.rel (%p233) target = $region44
        $region43: #{tpu_custom_call.1} parent=39 // pred_region
          %s236 = sand.u32 %s28, 1
          %s237 = sand.u32 %s28, 1
          %s238 = smul.addr %s237, 16
          %s239 = scalar_lea.vmem [#allocation3], %s238
          %s240 = smul.u32 2, %s18
          %s241 = smul.addr %s240, 4
          %s242 = scalar_lea.vmem %s0, %s241
          // Predicated region
          $region45: #{tpu_custom_call.1} parent=43 // pred_check
            _
          $region46: #{tpu_custom_call.1} parent=43 // pred_check_branch
            %244 = sbr.rel (0) target = $region48
          $region47: #{tpu_custom_call.1} parent=43 // pred_region
            // Predicated region
            $region49: #{tpu_custom_call.1} parent=47 // pred_check
              _
            $region50: #{tpu_custom_call.1} parent=47 // pred_check_branch
              %246 = sbr.rel (0) target = $region52
            $region51: #{tpu_custom_call.1} parent=47 // pred_region
              // Predicated region
              $region64: #{tpu_custom_call.1} parent=51 // pred_check
                _
              $region65: #{tpu_custom_call.1} parent=51 // pred_check_branch
                %264 = sbr.rel (0) target = $region67
              $region66: #{tpu_custom_call.1} parent=51 // pred_region
                loop: start=0, step=1, limit=1
                $region68: #{tpu_custom_call.1} parent=66 // loop_pre_header
                  _
                $region69: #{tpu_custom_call.1} parent=66 // loop_header
                  %s266 = sphi 0, %s270
                  %p267 = scmp.ge.s32.totalorder %s266, 1
                  %s271 = sphi %s242, %s242
                  %s272 = sphi %s239, %s239
                $region70: #{tpu_custom_call.1} parent=66 // loop_header_branch
                  %269 = sbr.rel (%p267) target = $region74
                $region71: #{tpu_custom_call.1} parent=66 // loop_body
                  %v273 = vld [vmem:[%s271] sm:$0xff]
                  %274 = vst [vmem:[%s272] sm:$0xff] %v273
                  %v275 = vld [vmem:[%s271 + $0x10] sm:$0xff]
                  %276 = vst [vmem:[%s272 + $0x8] sm:$0xff] %v275
                $region72: #{tpu_custom_call.1} parent=66 // loop_footer
                  %s270 = sadd.s32 1, %s266
                $region73: #{tpu_custom_call.1} parent=66 // loop_footer_branch
                  %265 = sbr.rel target = $region69
                $region74: #{tpu_custom_call.1} parent=66 // loop_exit
                  _
              $region67: #{tpu_custom_call.1} parent=51 // pred_fallthru
                _
              // Predicated region
              $region75: #{tpu_custom_call.1} parent=51 // pred_check
                _
              $region76: #{tpu_custom_call.1} parent=51 // pred_check_branch
                %278 = sbr.rel target = $region78
              $region77: #{tpu_custom_call.1} parent=51 // pred_region
                _
              $region78: #{tpu_custom_call.1} parent=51 // pred_fallthru
                _
            $region52: #{tpu_custom_call.1} parent=47 // pred_fallthru
              _
            // Predicated region
            $region53: #{tpu_custom_call.1} parent=47 // pred_check
              _
            $region54: #{tpu_custom_call.1} parent=47 // pred_check_branch
              %248 = sbr.rel target = $region56
            $region55: #{tpu_custom_call.1} parent=47 // pred_region
              %s250 = ssub.s32 256, 1
              loop: start=0, step=1, limit=1
              $region57: #{tpu_custom_call.1} parent=55 // loop_pre_header
                _
              $region58: #{tpu_custom_call.1} parent=55 // loop_header
                %s252 = sphi 0, %s256
                %p253 = scmp.ge.s32.totalorder %s252, 1
                %s257 = sphi %s242, %s242
                %s258 = sphi %s239, %s239
              $region59: #{tpu_custom_call.1} parent=55 // loop_header_branch
                %255 = sbr.rel (%p253) target = $region63
              $region60: #{tpu_custom_call.1} parent=55 // loop_body
                %v259 = vld [vmem:[%s257] sm:%s250]
                %260 = vst [vmem:[%s258] sm:%s250] %v259
                %v261 = vld [vmem:[%s257 + $0x10] sm:%s250]
                %262 = vst [vmem:[%s258 + $0x8] sm:%s250] %v261
              $region61: #{tpu_custom_call.1} parent=55 // loop_footer
                %s256 = sadd.s32 1, %s252
              $region62: #{tpu_custom_call.1} parent=55 // loop_footer_branch
                %251 = sbr.rel target = $region58
              $region63: #{tpu_custom_call.1} parent=55 // loop_exit
                _
            $region56: #{tpu_custom_call.1} parent=47 // pred_fallthru
              _
          $region48: #{tpu_custom_call.1} parent=43 // pred_fallthru
            _
          %279 = vnop
        $region44: #{tpu_custom_call.1} parent=39 // pred_fallthru
          _
      $region40: #{tpu_custom_call.1} parent=5 // pred_fallthru
        _
      %p280 = scmp.le.s32.totalorder 1, %s18
      %p281 = scmp.lt.s32.totalorder %s18, 3
      %p282 = pnand %p280, %p281
      %p283 = pneg %p282
      // Predicated region
      $region79: #{tpu_custom_call.1} parent=5 // pred_check
        _
      $region80: #{tpu_custom_call.1} parent=5 // pred_check_branch
        %285 = sbr.rel (%p282) target = $region82
      $region81: #{tpu_custom_call.1} parent=5 // pred_region
        %s286 = ssub.s32 %s18, 1
        %s287 = sand.u32 %s31, 1
        %s288 = sand.u32 %s31, 1
        %s289 = smul.addr %s288, 16
        %s290 = scalar_lea.vmem [#allocation3], %s289
        // Predicated region
        $region83: #{tpu_custom_call.1} parent=81 // pred_check
          %p291 = pneg %p44
        $region84: #{tpu_custom_call.1} parent=81 // pred_check_branch
          %293 = sbr.rel (%p291) target = $region86
        $region85: #{tpu_custom_call.1} parent=81 // pred_region
          _
        $region86: #{tpu_custom_call.1} parent=81 // pred_fallthru
          _
        %s294 = sand.u32 %s31, 1
        %s295 = sand.u32 %s31, 1
        %s296 = smul.addr %s295, 16
        %s297 = scalar_lea.vmem [#allocation3], %s296
        %p298 = pneg %p44
        %p299 = pneg %p41
        %p300 = pneg %p65
        %p301 = pneg %p62
        %p302 = pneg %p86
        %p303 = pneg %p83
        %p304 = pneg %p107
        %p305 = pneg %p104
        %p306 = pneg %p128
        %p307 = pneg %p125
        %p308 = pneg %p149
        %p309 = pneg %p146
        %p310 = pneg %p170
        %p311 = pneg %p167
        %p312 = pneg %p196
        %p313 = pneg %p193
        %s314 = sand.u32 %s183, 1
        %s315 = scalar_lea.sflag [#allocation5], %s314
        %s316 = sand.u32 %s183, 1
        %s317 = smul.addr %s316, 2
        %s318 = scalar_lea.vmem [#allocation4], %s317
        %s319 = smul.u32 2, %s23
        %s320 = smul.u32 2, %s23
        %v322 = vld [vmem:[%s290] sm:$0xff]
        %v323 = vld [vmem:[%s290 + $0x8] sm:$0xff]
        %v324 = vld [vmem:[%s1] sm:$0xf]
        %v325 = vld [vmem:[%s1 + $0x4] sm:$0xf]
        %v326 = vld [vmem:[%s1 + $0x8] sm:$0xf]
        %v327 = vld [vmem:[%s1 + $0xc] sm:$0xf]
        %v328 = vld [vmem:[%s2] sm:$0xff]
        %v329 = vld [vmem:[%s2 + $0x8] sm:$0xff]
        %v330 = vld [vmem:[%s2 + $0x10] sm:$0xff]
        %v331 = vld [vmem:[%s2 + $0x18] sm:$0xff]
        %333 = vset.pattern.permute.xlu0 0
        %334 = vperm.xlu0 %333, %v328
        %v335 = vpop.permute.xlu0 %334
        %338 = vset.pattern.permute.xlu0 0
        %339 = vperm.xlu0 %338, %v329
        %v340 = vpop.permute.xlu0 %339
        %343 = vset.pattern.permute.xlu0 0
        %344 = vperm.xlu0 %343, %v330
        %v345 = vpop.permute.xlu0 %344
        %348 = vset.pattern.permute.xlu0 0
        %349 = vperm.xlu0 %348, %v331
        %v350 = vpop.permute.xlu0 %349
        %v356 = vunpack.c.l.b16 %v324
        %v357 = vunpack.c.l.b16 %v325
        %v358 = vunpack.c.l.b16 %v326
        %v359 = vunpack.c.l.b16 %v327
        %v360 = vpack.c.b16 %v357, %v356
        %v361 = vpack.c.b16 %v359, %v358
        %v364 = vunpack.c.l.b16 %v322
        %v365 = vunpack.c.h.b16 %v322
        %v366 = vunpack.c.l.b16 %v323
        %v367 = vunpack.c.h.b16 %v323
        %v368 = vpack.c.b16 %v366, %v364
        %v369 = vpack.c.b16 %v367, %v365
        %vm372 = vcmask 130048
        %v374 = vsel %vm372, %v360, 0
        %v377 = vsel %vm372, %v361, 0
        %379 = vmatprep.subr.bf16.mxu0 0
        %380 = vmatpush1.bf16.msra.mxu0 0
        %381 = vmatprep.subr.bf16.mxu0 0
        %382 = vmatpush1.bf16.msra.mxu0 0
        %383 = vmatprep.subr.bf16.mxu0 0
        %384 = vmatpush1.bf16.msra.mxu0 0
        %385 = vmatprep.subr.bf16.mxu0 0
        %386 = vmatpush1.bf16.msra.mxu0 0
        %387 = vmatprep.subr.bf16.mxu0 0
        %388 = vmatpush1.bf16.msra.mxu0 0
        %389 = vmatprep.subr.bf16.mxu0 0
        %390 = vmatpush1.bf16.msra.mxu0 0
        %391 = vmatprep.subr.bf16.mxu0 0
        %392 = vmatpush1.bf16.msra.mxu0 0
        %393 = vmatprep.subr.bf16.mxu0 %v369
        %394 = vmatpush1.bf16.msra.mxu0 %v368
        %395 = vmatprep.subr.bf16.mxu0 0
        %396 = vmatpush2.bf16.msra.mxu0 0
        %397 = vmatprep.subr.bf16.mxu0 0
        %398 = vmatpush2.bf16.msra.mxu0 0
        %399 = vmatprep.subr.bf16.mxu0 0
        %400 = vmatpush2.bf16.msra.mxu0 0
        %401 = vmatprep.subr.bf16.mxu0 0
        %402 = vmatpush2.bf16.msra.mxu0 0
        %403 = vmatprep.subr.bf16.mxu0 0
        %404 = vmatpush2.bf16.msra.mxu0 0
        %405 = vmatprep.subr.bf16.mxu0 0
        %406 = vmatpush2.bf16.msra.mxu0 0
        %407 = vmatprep.subr.bf16.mxu0 0
        %408 = vmatpush2.bf16.msra.mxu0 0
        %409 = vmatprep.subr.bf16.mxu0 0
        %410 = vmatpush2.bf16.msra.mxu0 0
        %411 = vmatprep.mubr.bf16.mxu0 0
        %412 = vmatmul.mubr.bf16.gmra.mxu0 %v374
        %v413 = vpop.f32.mrf.mxu0
        %v414 = vadd.f32 %v335, %v413
        %v415 = vpop.f32.mrf.mxu0
        %v416 = vadd.f32 %v335, %v415
        %v417 = vpop.f32.mrf.mxu0
        %v418 = vadd.f32 %v340, %v417
        %v419 = vpop.f32.mrf.mxu0
        %v420 = vadd.f32 %v340, %v419
        %421 = vmatprep.mubr.bf16.mxu0 0
        %422 = vmatmul.mubr.bf16.gmra.mxu0 %v377
        %v423 = vpop.f32.mrf.mxu0
        %v424 = vadd.f32 %v345, %v423
        %v425 = vpop.f32.mrf.mxu0
        %v426 = vadd.f32 %v345, %v425
        %v427 = vpop.f32.mrf.mxu0
        %v428 = vadd.f32 %v350, %v427
        %v429 = vpop.f32.mrf.mxu0
        %v430 = vadd.f32 %v350, %v429
        %431 = vdwg.mxu0
        %v432 = vtanh.pop %v414
        %v433 = vtanh.pop %v416
        %v434 = vtanh.pop %v418
        %v435 = vtanh.pop %v420
        %v436 = vtanh.pop %v424
        %v437 = vtanh.pop %v426
        %v438 = vtanh.pop %v428
        %v439 = vtanh.pop %v430
        %v440 = vld [vmem:[%s3] sm:$0xf]
        %v441 = vld [vmem:[%s3 + $0x4] sm:$0xf]
        %v442 = vld [vmem:[%s3 + $0x8] sm:$0xf]
        %v443 = vld [vmem:[%s3 + $0xc] sm:$0xf]
        %v444 = vld [vmem:[%s4] sm:$0xff]
        %v445 = vld [vmem:[%s4 + $0x8] sm:$0xff]
        %v446 = vld [vmem:[%s4 + $0x10] sm:$0xff]
        %v447 = vld [vmem:[%s4 + $0x18] sm:$0xff]
        %v448 = vpack.c.bf16 %v434, %v432
        %v449 = vpack.c.bf16 %v435, %v433
        %v450 = vpack.c.bf16 %v438, %v436
        %v451 = vpack.c.bf16 %v439, %v437
        %453 = vset.pattern.permute.xlu0 0
        %454 = vperm.xlu0 %453, %v444
        %v455 = vpop.permute.xlu0 %454
        %458 = vset.pattern.permute.xlu0 0
        %459 = vperm.xlu0 %458, %v445
        %v460 = vpop.permute.xlu0 %459
        %463 = vset.pattern.permute.xlu0 0
        %464 = vperm.xlu0 %463, %v446
        %v465 = vpop.permute.xlu0 %464
        %468 = vset.pattern.permute.xlu0 0
        %469 = vperm.xlu0 %468, %v447
        %v470 = vpop.permute.xlu0 %469
        %v476 = vunpack.c.l.b16 %v440
        %v477 = vunpack.c.l.b16 %v441
        %v478 = vunpack.c.l.b16 %v442
        %v479 = vunpack.c.l.b16 %v443
        %v480 = vpack.c.b16 %v477, %v476
        %v481 = vpack.c.b16 %v479, %v478
        %vm482 = vcmask 261120
        %v484 = vsel %vm482, %v480, 0
        %v487 = vsel %vm482, %v481, 0
        %489 = vmatprep.subr.bf16.mxu0 0
        %490 = vmatpush1.bf16.msra.mxu0 0
        %491 = vmatprep.subr.bf16.mxu0 0
        %492 = vmatpush1.bf16.msra.mxu0 0
        %493 = vmatprep.subr.bf16.mxu0 0
        %494 = vmatpush1.bf16.msra.mxu0 0
        %495 = vmatprep.subr.bf16.mxu0 0
        %496 = vmatpush1.bf16.msra.mxu0 0
        %497 = vmatprep.subr.bf16.mxu0 0
        %498 = vmatpush1.bf16.msra.mxu0 0
        %499 = vmatprep.subr.bf16.mxu0 0
        %500 = vmatpush1.bf16.msra.mxu0 0
        %501 = vmatprep.subr.bf16.mxu0 %v451
        %502 = vmatpush1.bf16.msra.mxu0 %v450
        %503 = vmatprep.subr.bf16.mxu0 %v449
        %504 = vmatpush1.bf16.msra.mxu0 %v448
        %505 = vmatprep.subr.bf16.mxu0 0
        %506 = vmatpush2.bf16.msra.mxu0 0
        %507 = vmatprep.subr.bf16.mxu0 0
        %508 = vmatpush2.bf16.msra.mxu0 0
        %509 = vmatprep.subr.bf16.mxu0 0
        %510 = vmatpush2.bf16.msra.mxu0 0
        %511 = vmatprep.subr.bf16.mxu0 0
        %512 = vmatpush2.bf16.msra.mxu0 0
        %513 = vmatprep.subr.bf16.mxu0 0
        %514 = vmatpush2.bf16.msra.mxu0 0
        %515 = vmatprep.subr.bf16.mxu0 0
        %516 = vmatpush2.bf16.msra.mxu0 0
        %517 = vmatprep.subr.bf16.mxu0 0
        %518 = vmatpush2.bf16.msra.mxu0 0
        %519 = vmatprep.subr.bf16.mxu0 0
        %520 = vmatpush2.bf16.msra.mxu0 0
        %521 = vmatprep.mubr.bf16.mxu0 0
        %522 = vmatmul.mubr.bf16.gmra.mxu0 %v484
        %v523 = vpop.f32.mrf.mxu0
        %v524 = vadd.f32 %v455, %v523
        %v525 = vpop.f32.mrf.mxu0
        %v526 = vadd.f32 %v455, %v525
        %v527 = vpop.f32.mrf.mxu0
        %v528 = vadd.f32 %v460, %v527
        %v529 = vpop.f32.mrf.mxu0
        %v530 = vadd.f32 %v460, %v529
        %531 = vmatprep.mubr.bf16.mxu0 0
        %532 = vmatmul.mubr.bf16.gmra.mxu0 %v487
        %v533 = vpop.f32.mrf.mxu0
        %v534 = vadd.f32 %v465, %v533
        %v535 = vpop.f32.mrf.mxu0
        %v536 = vadd.f32 %v465, %v535
        %v537 = vpop.f32.mrf.mxu0
        %v538 = vadd.f32 %v470, %v537
        %v539 = vpop.f32.mrf.mxu0
        %v540 = vadd.f32 %v470, %v539
        %541 = vdwg.mxu0
        %v542 = vtanh.pop %v524
        %v543 = vtanh.pop %v526
        %v544 = vtanh.pop %v528
        %v545 = vtanh.pop %v530
        %v546 = vtanh.pop %v534
        %v547 = vtanh.pop %v536
        %v548 = vtanh.pop %v538
        %v549 = vtanh.pop %v540
        %v550 = vld [vmem:[%s5] sm:$0xff]
        %v551 = vld [vmem:[%s5 + $0x8] sm:$0xff]
        %v552 = vld [vmem:[%s5 + $0x10] sm:$0xff]
        %v553 = vld [vmem:[%s5 + $0x18] sm:$0xff]
        %v554 = vld [vmem:[#allocation2] sm:$0x1]
        %556 = vset.pattern.permute.xlu0 0
        %557 = vperm.xlu0 %556, %v550
        %v558 = vpop.permute.xlu0 %557
        %561 = vset.pattern.permute.xlu0 0
        %562 = vperm.xlu0 %561, %v551
        %v563 = vpop.permute.xlu0 %562
        %566 = vset.pattern.permute.xlu0 0
        %567 = vperm.xlu0 %566, %v552
        %v568 = vpop.permute.xlu0 %567
        %571 = vset.pattern.permute.xlu0 0
        %572 = vperm.xlu0 %571, %v553
        %v573 = vpop.permute.xlu0 %572
        %v575 = vmul.f32 %v542, %v558
        %v576 = vmul.f32 %v543, %v558
        %v577 = vmul.f32 %v544, %v563
        %v578 = vmul.f32 %v545, %v563
        %v579 = vmul.f32 %v546, %v568
        %v580 = vmul.f32 %v547, %v568
        %v581 = vmul.f32 %v548, %v573
        %v582 = vmul.f32 %v549, %v573
        %v583 = vadd.f32 %v575, %v577
        %v584 = vadd.f32 %v583, %v579
        %v585 = vadd.f32 %v584, %v581
        %v586 = vrot.slane %v585, 4
        %v587 = vadd.f32 %v585, %v586
        %v588 = vrot.slane %v587, 2
        %v589 = vadd.f32 %v587, %v588
        %v590 = vrot.slane %v589, 1
        %v591 = vadd.f32 %v589, %v590
        %v592 = vadd.f32 %v576, %v578
        %v593 = vadd.f32 %v592, %v580
        %v594 = vadd.f32 %v593, %v582
        %v595 = vrot.slane %v594, 4
        %v596 = vadd.f32 %v594, %v595
        %v597 = vrot.slane %v596, 2
        %v598 = vadd.f32 %v596, %v597
        %v599 = vrot.slane %v598, 1
        %v600 = vadd.f32 %v598, %v599
        %602 = vset.pattern.permute.xlu0 0
        %603 = vperm.xlu0 %602, %v554
        %v604 = vpop.permute.xlu0 %603
        %v606 = vlaneseq
        %v607 = vshrl.u32 %v606, 7
        %v608 = vsub.s32 0, %v607
        %v609 = vrot.slane %v604, %v608
        %v610 = vadd.f32 %v591, %v609
        %v611 = vadd.f32 %v600, %v609
        %v614 = vcombine.low %v610, %v611
        %v616 = vunpack.c.l.s4 1966171168
        %v617 = vunpack.c.0.s8 %v616
        %v618 = vlaneseq
        %v619 = vshrl.u32 %v618, 7
        %v620 = vsub.s32 %v617, %v619
        %v621 = vrot.slane %v614, %v620
        %v623 = vunpack.c.l.s4 1966171168
        %v624 = vunpack.c.0.s8 %v623
        %v625 = vlaneseq
        %v626 = vshrl.u32 %v625, 7
        %v627 = vsub.s32 %v624, %v626
        %v628 = vrot.slane %v621, %v627
        %v630 = vlaneseq
        %vm631 = vcmp.ge.s32.totalorder %v630, 0
        %vm632 = vcmp.lt.s32.totalorder %v630, 256
        %vm633 = vmand %vm631, %vm632
        %634 = vst.msk [vmem:[%s318] sm:$0x3] %vm633, %v628
        %s635 = sand.u32 %s183, 1
        %s636 = scalar_lea.sflag [#allocation5], %s635
        %s637 = sand.u32 %s183, 1
        %s638 = smul.addr %s637, 2
        %s639 = scalar_lea.vmem [#allocation4], %s638
        // Predicated region
        $region87: #{tpu_custom_call.1} parent=81 // pred_check
          %p640 = pneg %p193
        $region88: #{tpu_custom_call.1} parent=81 // pred_check_branch
          %642 = sbr.rel (%p640) target = $region90
        $region89: #{tpu_custom_call.1} parent=81 // pred_region
          %s643 = smul.u32 2, %s23
          %s645 = ssub.s32 32, 32
          %646 = vsyncadd %s636, %s645
          %s647 = smul.addr %s643, 16
          %s648 = scalar_lea.hbm %s7, %s647
          %s650 = sshll.u32 %s639, 4
          %s651 = int_to_ptr.vmem [resolvable:$true] %s650
          %653 = dma.vmem_to_hbm [thread:$0]  %s651, 32, %s648, %s636
        $region90: #{tpu_custom_call.1} parent=81 // pred_fallthru
          _
      $region82: #{tpu_custom_call.1} parent=5 // pred_fallthru
        _
      %p654 = scmp.le.s32.totalorder 2, %s18
      // Predicated region
      $region91: #{tpu_custom_call.1} parent=5 // pred_check
        %p655 = pneg %p654
      $region92: #{tpu_custom_call.1} parent=5 // pred_check_branch
        %657 = sbr.rel (%p655) target = $region94
      $region93: #{tpu_custom_call.1} parent=5 // pred_region
        %s658 = ssub.s32 %s18, 2
        // Predicated region
        $region95: #{tpu_custom_call.1} parent=93 // pred_check
          %p659 = pneg %p199
        $region96: #{tpu_custom_call.1} parent=93 // pred_check_branch
          %661 = sbr.rel (%p659) target = $region98
        $region97: #{tpu_custom_call.1} parent=93 // pred_region
          %s662 = sand.u32 %s184, 1
          %s663 = scalar_lea.sflag [#allocation5], %s662
          %s664 = sand.u32 %s184, 1
          %s665 = smul.addr %s664, 2
          %s666 = scalar_lea.vmem [#allocation4], %s665
          %667 = dma.done %s663, 32
        $region98: #{tpu_custom_call.1} parent=93 // pred_fallthru
          _
      $region94: #{tpu_custom_call.1} parent=5 // pred_fallthru
        _
    $region6: #{tpu_custom_call.1} parent=1 // loop_footer
      %s22 = sadd.s32 1, %s18
    $region7: #{tpu_custom_call.1} parent=1 // loop_footer_branch
      %17 = sbr.rel target = $region3
    $region8: #{tpu_custom_call.1} parent=1 // loop_exit
      _
    %668 = vsyncpa [#allocation5], 1
    %s669 = scalar_lea.sflag [#allocation5], 1
    %670 = vsyncpa %s669, 1

</llo_original>
